<compile_context>
chip_gen: v7x
topology: tpu7x:2x2x1
jax: 0.10.0
libtpu: 0.0.40
codegen_flags: <defaults>
</compile_context>

<pallas_src>
import jax
import jax.numpy as jnp
from jax.experimental import pallas as pl
from jax.experimental.pallas import tpu as pltpu

NUM_CLASSES = 2
_OUT_PAD = 8  # lane padding of the 2-class head (full-array last dim => legal block)


def _round_up(a, m):
    return (a + m - 1) // m * m


def sarcasm_mlp_kernel(x_ref, w1_ref, b1_ref, w2_ref, b2_ref, w3_ref, b3_ref,
                       o_ref):
    # In-kernel cast: x arrives in its storage dtype (f32 or bf16); bf16 feeds
    # the MXU, accumulation is f32.
    x = x_ref[...].astype(jnp.bfloat16)                      # [TB, D]
    # fc1 + relu
    h1 = jnp.dot(x, w1_ref[...], preferred_element_type=jnp.float32) + b1_ref[...]
    h1 = jnp.maximum(h1, 0.0).astype(jnp.bfloat16)
    # fc2 + relu
    h2 = jnp.dot(h1, w2_ref[...], preferred_element_type=jnp.float32) + b2_ref[...]
    h2 = jnp.maximum(h2, 0.0).astype(jnp.bfloat16)
    # fc3 (logits); columns >= NUM_CLASSES are exactly zero (zero-padded w3/b3).
    o_ref[...] = (jnp.dot(h2, w3_ref[...], preferred_element_type=jnp.float32)
                  + b3_ref[...]).astype(o_ref.dtype)


def prepare_params(params):
    """One-time conversion: bf16 weights, f32 biases, head padded to _OUT_PAD."""
    w3, b3 = params["w3"], params["b3"].reshape(1, -1)
    out_dim = w3.shape[1]
    w3p = jnp.zeros((w3.shape[0], _OUT_PAD), jnp.float32).at[:, :out_dim].set(w3)
    b3p = jnp.zeros((1, _OUT_PAD), jnp.float32).at[:, :out_dim].set(b3)
    return {
        "w1": params["w1"].astype(jnp.bfloat16),
        "b1": params["b1"].reshape(1, -1).astype(jnp.float32),
        "w2": params["w2"].astype(jnp.bfloat16),
        "b2": params["b2"].reshape(1, -1).astype(jnp.float32),
        "w3": w3p.astype(jnp.bfloat16),
        "b3": b3p,
    }


def sarcasm_mlp(x, prepared, *, block_batch=1024, vmem_budget_bytes=16 << 20):
    """x: [B, D] (f32 or bf16). prepared: output of prepare_params. Returns [B, 2] f32."""
    B, D = x.shape
    w1, b1 = prepared["w1"], prepared["b1"]   # [D,128] bf16, [1,128] f32
    w2, b2 = prepared["w2"], prepared["b2"]   # [128,64] bf16, [1,64]  f32
    w3, b3 = prepared["w3"], prepared["b3"]   # [64,8]  bf16, [1,8]   f32

    # Batch tile: bounded by (a) caller block_batch, (b) double-buffered VMEM
    # budget for x + out tiles, (c) enough grid steps for pipelining.
    x_bytes = jnp.dtype(x.dtype).itemsize
    weight_bytes = sum(int(v.size) * jnp.dtype(v.dtype).itemsize
                       for v in (w1, b1, w2, b2, w3, b3))
    per_row_bytes = 2 * D * x_bytes + 2 * _OUT_PAD * 4        # dbl-buffered in + out
    tb_cap = max(8, int((vmem_budget_bytes - weight_bytes) // per_row_bytes))
    TB = min(int(block_batch), tb_cap, _round_up(pl.cdiv(B, 8), 8))
    TB = max(8, (TB // 8) * 8)
    grid = (pl.cdiv(B, TB),)                                   # ragged last tile OK

    # Scoped VMEM: cover the budget + weights + slack; stays well under 64 MiB
    # physical (v7x) and above v5e's 16 MiB default.
    vmem_limit = int(min(48 << 20,
                         max(32 << 20, vmem_budget_bytes + weight_bytes + (4 << 20))))

    def resident(shape):
        # Constant block index -> weight/bias stays VMEM-resident across steps.
        return pl.BlockSpec(shape, lambda i: (0, 0))

    out = pl.pallas_call(
        sarcasm_mlp_kernel,
        out_shape=jax.ShapeDtypeStruct((B, _OUT_PAD), jnp.float32),
        grid=grid,
        in_specs=[
            pl.BlockSpec((TB, D), lambda i: (i, 0)),   # streamed batch tile of x
            resident(w1.shape), resident(b1.shape),
            resident(w2.shape), resident(b2.shape),
            resident(w3.shape), resident(b3.shape),
        ],
        out_specs=pl.BlockSpec((TB, _OUT_PAD), lambda i: (i, 0)),
        compiler_params=pltpu.CompilerParams(
            dimension_semantics=("parallel",),
            vmem_limit_bytes=vmem_limit),
    )(x, w1, b1, w2, b2, w3, b3)

    return out[:, :NUM_CLASSES]


def init_params(key, input_dim):
    """Deterministic init mimicking PyTorch nn.Linear default U(-1/sqrt(fan_in), ...)."""
    def linear(k, fan_in, fan_out):
        kw, kb = jax.random.split(k)
        bound = 1.0 / jnp.sqrt(fan_in)
        w = jax.random.uniform(kw, (fan_in, fan_out), jnp.float32, -bound, bound)
        b = jax.random.uniform(kb, (1, fan_out), jnp.float32, -bound, bound)
        return w, b

    k1, k2, k3 = jax.random.split(key, 3)
    w1, b1 = linear(k1, input_dim, 128)
    w2, b2 = linear(k2, 128, 64)
    w3, b3 = linear(k3, 64, NUM_CLASSES)
    return {"w1": w1, "b1": b1, "w2": w2, "b2": b2, "w3": w3, "b3": b3}


if __name__ == "__main__":
    key = jax.random.PRNGKey(0)
    kx, kp = jax.random.split(key)

    # mpnet-style 768-dim embeddings; batch=20 with block_batch=8 gives a
    # 3-step grid whose last tile is ragged (exercises the masked tail path).
    batch = 20
    input_dim = 768
    x = jax.random.normal(kx, (batch, input_dim), jnp.float32)
    params = init_params(kp, input_dim)
    prepared = prepare_params(params)

    out = sarcasm_mlp(x, prepared, block_batch=8)
    jax.block_until_ready(out)
    assert out.shape == (batch, NUM_CLASSES)

    # Pure-JAX reference with the same bf16 input/weight quantization.
    # NOTE: bf16 quantization is a deliberate numerical deviation from the f32
    # PyTorch module (checked against an identically quantized reference).
    xb = x.astype(jnp.bfloat16)
    h1 = jnp.maximum(
        jnp.dot(xb, params["w1"].astype(jnp.bfloat16),
                preferred_element_type=jnp.float32) + params["b1"], 0.0)
    h2 = jnp.maximum(
        jnp.dot(h1.astype(jnp.bfloat16), params["w2"].astype(jnp.bfloat16),
                preferred_element_type=jnp.float32) + params["b2"], 0.0)
    ref = (jnp.dot(h2.astype(jnp.bfloat16), params["w3"].astype(jnp.bfloat16),
                   preferred_element_type=jnp.float32) + params["b3"])
    assert jnp.allclose(out, ref, atol=2e-2, rtol=2e-2)

    print("KERNEL_OK")
</pallas_src>

<mosaic_0001>
module attributes {stable_mosaic.version = 11 : i64} {
  func.func @sarcasm_mlp_kernel(%arg0: i32, %arg1: memref<8x768xf32, #tpu.memory_space<vmem>>, %arg2: memref<768x128xbf16, #tpu.memory_space<vmem>>, %arg3: memref<1x128xf32, #tpu.memory_space<vmem>>, %arg4: memref<128x64xbf16, #tpu.memory_space<vmem>>, %arg5: memref<1x64xf32, #tpu.memory_space<vmem>>, %arg6: memref<64x8xbf16, #tpu.memory_space<vmem>>, %arg7: memref<1x8xf32, #tpu.memory_space<vmem>>, %arg8: memref<8x8xf32, #tpu.memory_space<vmem>>) attributes {dimension_semantics = [#tpu.dimension_semantics<parallel>], iteration_bounds = array<i64: 3>, scalar_prefetch = 0 : i64, scratch_operands = 0 : i64, tpu.core_type = #tpu.core_type<tc>, window_params = [{transform_indices = @transform_0, window_bounds = array<i64: 8, 768>}, {pipeline_mode = #tpu.pipeline_mode<synchronous>, transform_indices = @transform_1, window_bounds = array<i64: 768, 128>}, {pipeline_mode = #tpu.pipeline_mode<synchronous>, transform_indices = @transform_2, window_bounds = array<i64: 1, 128>}, {pipeline_mode = #tpu.pipeline_mode<synchronous>, transform_indices = @transform_3, window_bounds = array<i64: 128, 64>}, {pipeline_mode = #tpu.pipeline_mode<synchronous>, transform_indices = @transform_4, window_bounds = array<i64: 1, 64>}, {pipeline_mode = #tpu.pipeline_mode<synchronous>, transform_indices = @transform_5, window_bounds = array<i64: 64, 8>}, {pipeline_mode = #tpu.pipeline_mode<synchronous>, transform_indices = @transform_6, window_bounds = array<i64: 1, 8>}, {transform_indices = @transform_7, window_bounds = array<i64: 8, 8>}]} {
    %c0 = arith.constant 0 : index
    %c0_0 = arith.constant 0 : index
    %0 = vector.load %arg1[%c0, %c0_0] : memref<8x768xf32, #tpu.memory_space<vmem>>, vector<8x768xf32>
    %1 = arith.truncf %0 : vector<8x768xf32> to vector<8x768xbf16>
    %c0_1 = arith.constant 0 : index
    %c0_2 = arith.constant 0 : index
    %2 = vector.load %arg2[%c0_1, %c0_2] : memref<768x128xbf16, #tpu.memory_space<vmem>>, vector<768x128xbf16>
    %cst = arith.constant dense<0.000000e+00> : vector<8x128xf32>
    %3 = tpu.matmul %1, %2, %cst {dimension_numbers = #tpu.dot_dimension_numbers<[1], [0], [0], [1], [0, 0, 1, 1], [], []>} : vector<8x768xbf16>, vector<768x128xbf16>, vector<8x128xf32> -> vector<8x128xf32>
    %c0_3 = arith.constant 0 : index
    %c0_4 = arith.constant 0 : index
    %4 = vector.load %arg3[%c0_3, %c0_4] : memref<1x128xf32, #tpu.memory_space<vmem>>, vector<1x128xf32>
    %5 = vector.broadcast %4 : vector<1x128xf32> to vector<8x128xf32>
    %6 = arith.addf %3, %5 : vector<8x128xf32>
    %cst_5 = arith.constant 0.000000e+00 : f32
    %7 = vector.broadcast %cst_5 : f32 to vector<8x128xf32>
    %8 = arith.maximumf %6, %7 : vector<8x128xf32>
    %9 = arith.truncf %8 : vector<8x128xf32> to vector<8x128xbf16>
    %c0_6 = arith.constant 0 : index
    %c0_7 = arith.constant 0 : index
    %10 = vector.load %arg4[%c0_6, %c0_7] : memref<128x64xbf16, #tpu.memory_space<vmem>>, vector<128x64xbf16>
    %cst_8 = arith.constant dense<0.000000e+00> : vector<8x64xf32>
    %11 = tpu.matmul %9, %10, %cst_8 {dimension_numbers = #tpu.dot_dimension_numbers<[1], [0], [0], [1], [0, 0, 1, 1], [], []>} : vector<8x128xbf16>, vector<128x64xbf16>, vector<8x64xf32> -> vector<8x64xf32>
    %c0_9 = arith.constant 0 : index
    %c0_10 = arith.constant 0 : index
    %12 = vector.load %arg5[%c0_9, %c0_10] : memref<1x64xf32, #tpu.memory_space<vmem>>, vector<1x64xf32>
    %13 = vector.broadcast %12 : vector<1x64xf32> to vector<8x64xf32>
    %14 = arith.addf %11, %13 : vector<8x64xf32>
    %cst_11 = arith.constant 0.000000e+00 : f32
    %15 = vector.broadcast %cst_11 : f32 to vector<8x64xf32>
    %16 = arith.maximumf %14, %15 : vector<8x64xf32>
    %17 = arith.truncf %16 : vector<8x64xf32> to vector<8x64xbf16>
    %c0_12 = arith.constant 0 : index
    %c0_13 = arith.constant 0 : index
    %18 = vector.load %arg6[%c0_12, %c0_13] : memref<64x8xbf16, #tpu.memory_space<vmem>>, vector<64x8xbf16>
    %cst_14 = arith.constant dense<0.000000e+00> : vector<8x8xf32>
    %19 = tpu.matmul %17, %18, %cst_14 {dimension_numbers = #tpu.dot_dimension_numbers<[1], [0], [0], [1], [0, 0, 1, 1], [], []>} : vector<8x64xbf16>, vector<64x8xbf16>, vector<8x8xf32> -> vector<8x8xf32>
    %c0_15 = arith.constant 0 : index
    %c0_16 = arith.constant 0 : index
    %20 = vector.load %arg7[%c0_15, %c0_16] : memref<1x8xf32, #tpu.memory_space<vmem>>, vector<1x8xf32>
    %21 = vector.broadcast %20 : vector<1x8xf32> to vector<8x8xf32>
    %22 = arith.addf %19, %21 : vector<8x8xf32>
    %c0_17 = arith.constant 0 : index
    %c0_18 = arith.constant 0 : index
    %23 = vector.load %arg8[%c0_17, %c0_18] : memref<8x8xf32, #tpu.memory_space<vmem>>, vector<8x8xf32>
    tpu.vector_store %arg8[%c0_17, %c0_18], %22 {strides = array<i32>} : memref<8x8xf32, #tpu.memory_space<vmem>>, vector<8x8xf32>,
    return
  }
  func.func @transform_0(%arg0: i32) -> (i32, i32) {
    %c0_i32 = arith.constant 0 : i32
    %c0_i32_0 = arith.constant 0 : i32
    return %arg0, %c0_i32 : i32, i32
  }
  func.func @transform_1(%arg0: i32) -> (i32, i32) {
    %c0_i32 = arith.constant 0 : i32
    %c0_i32_0 = arith.constant 0 : i32
    %c0_i32_1 = arith.constant 0 : i32
    return %c0_i32, %c0_i32_0 : i32, i32
  }
  func.func @transform_2(%arg0: i32) -> (i32, i32) {
    %c0_i32 = arith.constant 0 : i32
    %c0_i32_0 = arith.constant 0 : i32
    %c0_i32_1 = arith.constant 0 : i32
    return %c0_i32, %c0_i32_0 : i32, i32
  }
  func.func @transform_3(%arg0: i32) -> (i32, i32) {
    %c0_i32 = arith.constant 0 : i32
    %c0_i32_0 = arith.constant 0 : i32
    %c0_i32_1 = arith.constant 0 : i32
    return %c0_i32, %c0_i32_0 : i32, i32
  }
  func.func @transform_4(%arg0: i32) -> (i32, i32) {
    %c0_i32 = arith.constant 0 : i32
    %c0_i32_0 = arith.constant 0 : i32
    %c0_i32_1 = arith.constant 0 : i32
    return %c0_i32, %c0_i32_0 : i32, i32
  }
  func.func @transform_5(%arg0: i32) -> (i32, i32) {
    %c0_i32 = arith.constant 0 : i32
    %c0_i32_0 = arith.constant 0 : i32
    %c0_i32_1 = arith.constant 0 : i32
    return %c0_i32, %c0_i32_0 : i32, i32
  }
  func.func @transform_6(%arg0: i32) -> (i32, i32) {
    %c0_i32 = arith.constant 0 : i32
    %c0_i32_0 = arith.constant 0 : i32
    %c0_i32_1 = arith.constant 0 : i32
    return %c0_i32, %c0_i32_0 : i32, i32
  }
  func.func @transform_7(%arg0: i32) -> (i32, i32) {
    %c0_i32 = arith.constant 0 : i32
    %c0_i32_0 = arith.constant 0 : i32
    return %arg0, %c0_i32 : i32, i32
  }
}

</mosaic_0001>

<llo_original>
// kernel: tpu_custom_call.1
$region0: #{tpu_custom_call.1}
  #allocation0 [shape = 'u32[]', space=smem, size = 0x4, offset = 0x4, fixed_abs, tag = 'smem constant byte address 0x4 - core index']
  #allocation1 [shape = 'u32[144,128]{1,0:T(1,128)}', space=vmem, size = 0x12000, scoped, tag = 'internal scratch']
  %s0 = inlined_call_operand.hbm [shape: f32[20,768], index: 0, kind: input, shape index: {}]
  %s1 = inlined_call_operand.hbm [shape: bf16[768,128], index: 1, kind: input, shape index: {}]
  %s2 = inlined_call_operand.vmem [shape: f32[1,128], index: 2, kind: input, shape index: {}]
  %s3 = inlined_call_operand.vmem [shape: bf16[128,64], index: 3, kind: input, shape index: {}]
  %s4 = inlined_call_operand.vmem [shape: f32[1,64], index: 4, kind: input, shape index: {}]
  %s5 = inlined_call_operand.vmem [shape: bf16[64,8], index: 5, kind: input, shape index: {}]
  %s6 = inlined_call_operand.vmem [shape: f32[1,8], index: 6, kind: input, shape index: {}]
  %s7 = inlined_call_operand.vmem [shape: f32[20,8], index: 7, kind: output, shape index: {}]
  %s8 = sld [smem:[#allocation0]]
  $region69: #{tpu_custom_call.1} parent=0
    _
  %s10 = ssub.s32 1, %s8
  %s11 = scalar_select 0, %s10, %s8
  $region1: #{tpu_custom_call.1} parent=0
    #allocation2 [shape = 'u8[49152]{0}', space=vmem, size = 0xc000, scoped, tag = 'input window, operand 0']
    #allocation3 [shape = 's32[2]{0}', space=sflag, size = 0x8, scoped, tag = 'scoped memory for tpu_custom_call.1']
    #allocation4 [shape = 'u8[196608]{0}', space=vmem, size = 0x30000, scoped, tag = 'input window, operand 1, single buffered']
    #allocation5 [shape = 's32[1]{0}', space=sflag, size = 0x4, scoped, tag = 'scoped memory for tpu_custom_call.1']
    %12 = vsyncpa [#allocation3], 0
    %s13 = scalar_lea.sflag [#allocation3], 1
    %14 = vsyncpa %s13, 0
    %15 = vsyncpa [#allocation5], 0
    loop: start=0, step=1, limit=5
    $region2: #{tpu_custom_call.1} parent=1 // loop_pre_header
      _
    $region3: #{tpu_custom_call.1} parent=1 // loop_header
      %s17 = sphi 0, %s21
      %p18 = scmp.ge.s32.totalorder %s17, 5
      %s27 = sphi 0, %s29
      %s30 = sphi 0, %s27
      %s31 = sphi 0, %s30
      %s47 = sphi 0, %s31
      %s51 = sphi 0, %s51
      %s53 = sphi 0, %s51
      %s54 = sphi 0, %s53
      %s68 = sphi 0, %s54
      %s72 = sphi 0, %s72
      %s74 = sphi 0, %s72
      %s75 = sphi 0, %s74
      %s89 = sphi 0, %s75
      %s93 = sphi 0, %s93
      %s95 = sphi 0, %s93
      %s96 = sphi 0, %s95
      %s110 = sphi 0, %s96
      %s114 = sphi 0, %s114
      %s116 = sphi 0, %s114
      %s117 = sphi 0, %s116
      %s131 = sphi 0, %s117
      %s135 = sphi 0, %s135
      %s137 = sphi 0, %s135
      %s138 = sphi 0, %s137
      %s152 = sphi 0, %s138
      %s156 = sphi 0, %s156
      %s158 = sphi 0, %s156
      %s159 = sphi 0, %s158
      %s173 = sphi 0, %s159
      %s179 = sphi 0, %s181
      %s182 = sphi 0, %s179
      %s183 = sphi 0, %s182
      %s199 = sphi 0, %s183
    $region4: #{tpu_custom_call.1} parent=1 // loop_header_branch
      %20 = sbr.rel (%p18) target = $region8
    $region5: #{tpu_custom_call.1} parent=1 // loop_body
      %s22 = ssub.s32 %s17, 1
      %s23 = ssub.s32 %s17, 2
      %s24 = sadd.s32 %s17, 1
      %s25 = ssub.s32 %s17, %s24
      %p26 = scmp.eq.s32.totalorder %s25, 0
      %s28 = sadd.s32 %s27, 1
      %s29 = scalar_select %p26, %s27, %s28
      %p32 = pneg %p26
      %p33 = scmp.eq.s32.totalorder %s17, 2
      %p34 = por %p32, %p33
      %p35 = scmp.ne.s32.totalorder %s27, %s30
      %p36 = scmp.eq.s32.totalorder %s17, 0
      %p37 = por %p35, %p36
      %p38 = scmp.ne.s32.totalorder %s27, %s30
      %p39 = scmp.eq.s32.totalorder %s22, 2
      %p40 = por %p38, %p39
      %p41 = scmp.ne.s32.totalorder %s30, %s31
      %p42 = scmp.eq.s32.totalorder %s22, 0
      %p43 = por %p41, %p42
      %p44 = scmp.ne.s32.totalorder %s30, %s31
      %p45 = scmp.eq.s32.totalorder %s23, 2
      %p46 = por %p44, %p45
      %p48 = scmp.ne.s32.totalorder %s31, %s47
      %p49 = scmp.eq.s32.totalorder %s23, 0
      %p50 = por %p48, %p49
      %s52 = sadd.s32 %s51, 1
      %p55 = scmp.eq.s32.totalorder %s17, 2
      %p56 = scmp.ne.s32.totalorder %s51, %s53
      %p57 = scmp.eq.s32.totalorder %s17, 0
      %p58 = por %p56, %p57
      %p59 = scmp.ne.s32.totalorder %s51, %s53
      %p60 = scmp.eq.s32.totalorder %s22, 2
      %p61 = por %p59, %p60
      %p62 = scmp.ne.s32.totalorder %s53, %s54
      %p63 = scmp.eq.s32.totalorder %s22, 0
      %p64 = por %p62, %p63
      %p65 = scmp.ne.s32.totalorder %s53, %s54
      %p66 = scmp.eq.s32.totalorder %s23, 2
      %p67 = por %p65, %p66
      %p69 = scmp.ne.s32.totalorder %s54, %s68
      %p70 = scmp.eq.s32.totalorder %s23, 0
      %p71 = por %p69, %p70
      %s73 = sadd.s32 %s72, 1
      %p76 = scmp.eq.s32.totalorder %s17, 2
      %p77 = scmp.ne.s32.totalorder %s72, %s74
      %p78 = scmp.eq.s32.totalorder %s17, 0
      %p79 = por %p77, %p78
      %p80 = scmp.ne.s32.totalorder %s72, %s74
      %p81 = scmp.eq.s32.totalorder %s22, 2
      %p82 = por %p80, %p81
      %p83 = scmp.ne.s32.totalorder %s74, %s75
      %p84 = scmp.eq.s32.totalorder %s22, 0
      %p85 = por %p83, %p84
      %p86 = scmp.ne.s32.totalorder %s74, %s75
      %p87 = scmp.eq.s32.totalorder %s23, 2
      %p88 = por %p86, %p87
      %p90 = scmp.ne.s32.totalorder %s75, %s89
      %p91 = scmp.eq.s32.totalorder %s23, 0
      %p92 = por %p90, %p91
      %s94 = sadd.s32 %s93, 1
      %p97 = scmp.eq.s32.totalorder %s17, 2
      %p98 = scmp.ne.s32.totalorder %s93, %s95
      %p99 = scmp.eq.s32.totalorder %s17, 0
      %p100 = por %p98, %p99
      %p101 = scmp.ne.s32.totalorder %s93, %s95
      %p102 = scmp.eq.s32.totalorder %s22, 2
      %p103 = por %p101, %p102
      %p104 = scmp.ne.s32.totalorder %s95, %s96
      %p105 = scmp.eq.s32.totalorder %s22, 0
      %p106 = por %p104, %p105
      %p107 = scmp.ne.s32.totalorder %s95, %s96
      %p108 = scmp.eq.s32.totalorder %s23, 2
      %p109 = por %p107, %p108
      %p111 = scmp.ne.s32.totalorder %s96, %s110
      %p112 = scmp.eq.s32.totalorder %s23, 0
      %p113 = por %p111, %p112
      %s115 = sadd.s32 %s114, 1
      %p118 = scmp.eq.s32.totalorder %s17, 2
      %p119 = scmp.ne.s32.totalorder %s114, %s116
      %p120 = scmp.eq.s32.totalorder %s17, 0
      %p121 = por %p119, %p120
      %p122 = scmp.ne.s32.totalorder %s114, %s116
      %p123 = scmp.eq.s32.totalorder %s22, 2
      %p124 = por %p122, %p123
      %p125 = scmp.ne.s32.totalorder %s116, %s117
      %p126 = scmp.eq.s32.totalorder %s22, 0
      %p127 = por %p125, %p126
      %p128 = scmp.ne.s32.totalorder %s116, %s117
      %p129 = scmp.eq.s32.totalorder %s23, 2
      %p130 = por %p128, %p129
      %p132 = scmp.ne.s32.totalorder %s117, %s131
      %p133 = scmp.eq.s32.totalorder %s23, 0
      %p134 = por %p132, %p133
      %s136 = sadd.s32 %s135, 1
      %p139 = scmp.eq.s32.totalorder %s17, 2
      %p140 = scmp.ne.s32.totalorder %s135, %s137
      %p141 = scmp.eq.s32.totalorder %s17, 0
      %p142 = por %p140, %p141
      %p143 = scmp.ne.s32.totalorder %s135, %s137
      %p144 = scmp.eq.s32.totalorder %s22, 2
      %p145 = por %p143, %p144
      %p146 = scmp.ne.s32.totalorder %s137, %s138
      %p147 = scmp.eq.s32.totalorder %s22, 0
      %p148 = por %p146, %p147
      %p149 = scmp.ne.s32.totalorder %s137, %s138
      %p150 = scmp.eq.s32.totalorder %s23, 2
      %p151 = por %p149, %p150
      %p153 = scmp.ne.s32.totalorder %s138, %s152
      %p154 = scmp.eq.s32.totalorder %s23, 0
      %p155 = por %p153, %p154
      %s157 = sadd.s32 %s156, 1
      %p160 = scmp.eq.s32.totalorder %s17, 2
      %p161 = scmp.ne.s32.totalorder %s156, %s158
      %p162 = scmp.eq.s32.totalorder %s17, 0
      %p163 = por %p161, %p162
      %p164 = scmp.ne.s32.totalorder %s156, %s158
      %p165 = scmp.eq.s32.totalorder %s22, 2
      %p166 = por %p164, %p165
      %p167 = scmp.ne.s32.totalorder %s158, %s159
      %p168 = scmp.eq.s32.totalorder %s22, 0
      %p169 = por %p167, %p168
      %p170 = scmp.ne.s32.totalorder %s158, %s159
      %p171 = scmp.eq.s32.totalorder %s23, 2
      %p172 = por %p170, %p171
      %p174 = scmp.ne.s32.totalorder %s159, %s173
      %p175 = scmp.eq.s32.totalorder %s23, 0
      %p176 = por %p174, %p175
      %s177 = ssub.s32 %s17, %s24
      %p178 = scmp.eq.s32.totalorder %s177, 0
      %s180 = sadd.s32 %s179, 1
      %s181 = scalar_select %p178, %s179, %s180
      %p184 = pneg %p178
      %p185 = scmp.eq.s32.totalorder %s17, 2
      %p186 = por %p184, %p185
      %p187 = scmp.ne.s32.totalorder %s179, %s182
      %p188 = scmp.eq.s32.totalorder %s17, 0
      %p189 = por %p187, %p188
      %p190 = scmp.ne.s32.totalorder %s179, %s182
      %p191 = scmp.eq.s32.totalorder %s22, 2
      %p192 = por %p190, %p191
      %p193 = scmp.ne.s32.totalorder %s182, %s183
      %p194 = scmp.eq.s32.totalorder %s22, 0
      %p195 = por %p193, %p194
      %p196 = scmp.ne.s32.totalorder %s182, %s183
      %p197 = scmp.eq.s32.totalorder %s23, 2
      %p198 = por %p196, %p197
      %p200 = scmp.ne.s32.totalorder %s183, %s199
      %p201 = scmp.eq.s32.totalorder %s23, 0
      %p202 = por %p200, %p201
      %p203 = scmp.le.s32.totalorder 1, %s17
      %p204 = scmp.lt.s32.totalorder %s17, 4
      %p205 = pnand %p203, %p204
      %p206 = pneg %p205
      // Predicated region
      $region9: #{tpu_custom_call.1} parent=5 // pred_check
        _
      $region10: #{tpu_custom_call.1} parent=5 // pred_check_branch
        %208 = sbr.rel (%p205) target = $region12
      $region11: #{tpu_custom_call.1} parent=5 // pred_region
        %s209 = ssub.s32 %s17, 1
        // Predicated region
        $region13: #{tpu_custom_call.1} parent=11 // pred_check
          %p210 = pneg %p64
        $region14: #{tpu_custom_call.1} parent=11 // pred_check_branch
          %212 = sbr.rel (%p210) target = $region16
        $region15: #{tpu_custom_call.1} parent=11 // pred_region
          %s214 = ssub.s32 6144, 6144
          %215 = vsyncadd [#allocation5], %s214
          %s216 = sshll.u32 [#allocation4], 4
          %s217 = int_to_ptr.vmem [resolvable:$true] %s216
          %222 = dma.hbm_to_vmem [thread:$0]  %s1, 6144, %s217, [#allocation5], 64, 64, 4
        $region16: #{tpu_custom_call.1} parent=11 // pred_fallthru
          _
        // Predicated region
        $region17: #{tpu_custom_call.1} parent=11 // pred_check
          %p223 = pneg %p85
        $region18: #{tpu_custom_call.1} parent=11 // pred_check_branch
          %225 = sbr.rel (%p223) target = $region20
        $region19: #{tpu_custom_call.1} parent=11 // pred_region
          _
        $region20: #{tpu_custom_call.1} parent=11 // pred_fallthru
          _
        // Predicated region
        $region21: #{tpu_custom_call.1} parent=11 // pred_check
          %p226 = pneg %p106
        $region22: #{tpu_custom_call.1} parent=11 // pred_check_branch
          %228 = sbr.rel (%p226) target = $region24
        $region23: #{tpu_custom_call.1} parent=11 // pred_region
          _
        $region24: #{tpu_custom_call.1} parent=11 // pred_fallthru
          _
        // Predicated region
        $region25: #{tpu_custom_call.1} parent=11 // pred_check
          %p229 = pneg %p127
        $region26: #{tpu_custom_call.1} parent=11 // pred_check_branch
          %231 = sbr.rel (%p229) target = $region28
        $region27: #{tpu_custom_call.1} parent=11 // pred_region
          _
        $region28: #{tpu_custom_call.1} parent=11 // pred_fallthru
          _
        // Predicated region
        $region29: #{tpu_custom_call.1} parent=11 // pred_check
          %p232 = pneg %p148
        $region30: #{tpu_custom_call.1} parent=11 // pred_check_branch
          %234 = sbr.rel (%p232) target = $region32
        $region31: #{tpu_custom_call.1} parent=11 // pred_region
          _
        $region32: #{tpu_custom_call.1} parent=11 // pred_fallthru
          _
        // Predicated region
        $region33: #{tpu_custom_call.1} parent=11 // pred_check
          %p235 = pneg %p169
        $region34: #{tpu_custom_call.1} parent=11 // pred_check_branch
          %237 = sbr.rel (%p235) target = $region36
        $region35: #{tpu_custom_call.1} parent=11 // pred_region
          _
        $region36: #{tpu_custom_call.1} parent=11 // pred_fallthru
          _
      $region12: #{tpu_custom_call.1} parent=5 // pred_fallthru
        _
      %p238 = scmp.lt.s32.totalorder %s17, 3
      // Predicated region
      $region37: #{tpu_custom_call.1} parent=5 // pred_check
        %p239 = pneg %p238
      $region38: #{tpu_custom_call.1} parent=5 // pred_check_branch
        %241 = sbr.rel (%p239) target = $region40
      $region39: #{tpu_custom_call.1} parent=5 // pred_region
        // Predicated region
        $region41: #{tpu_custom_call.1} parent=39 // pred_check
          %p242 = pneg %p37
        $region42: #{tpu_custom_call.1} parent=39 // pred_check_branch
          %244 = sbr.rel (%p242) target = $region44
        $region43: #{tpu_custom_call.1} parent=39 // pred_region
          %s245 = sand.u32 %s27, 1
          %s246 = scalar_lea.sflag [#allocation3], %s245
          %s247 = sand.u32 %s27, 1
          %s248 = smul.addr %s247, 48
          %s249 = scalar_lea.vmem [#allocation2], %s248
          %s251 = ssub.s32 768, 768
          %252 = vsyncadd %s246, %s251
          %s253 = smul.addr %s17, 6
          %s254 = smul.addr %s253, 128
          %s255 = scalar_lea.hbm %s0, %s254
          %s257 = sshll.u32 %s249, 4
          %s258 = int_to_ptr.vmem [resolvable:$true] %s257
          %260 = dma.hbm_to_vmem [thread:$0]  %s255, 768, %s258, %s246
        $region44: #{tpu_custom_call.1} parent=39 // pred_fallthru
          _
      $region40: #{tpu_custom_call.1} parent=5 // pred_fallthru
        _
      %p261 = scmp.le.s32.totalorder 1, %s17
      %p262 = scmp.lt.s32.totalorder %s17, 4
      %p263 = pnand %p261, %p262
      %p264 = pneg %p263
      // Predicated region
      $region45: #{tpu_custom_call.1} parent=5 // pred_check
        _
      $region46: #{tpu_custom_call.1} parent=5 // pred_check_branch
        %266 = sbr.rel (%p263) target = $region48
      $region47: #{tpu_custom_call.1} parent=5 // pred_region
        %s267 = ssub.s32 %s17, 1
        %s268 = sand.u32 %s30, 1
        %s269 = scalar_lea.sflag [#allocation3], %s268
        %s270 = sand.u32 %s30, 1
        %s271 = smul.addr %s270, 48
        %s272 = scalar_lea.vmem [#allocation2], %s271
        // Predicated region
        $region49: #{tpu_custom_call.1} parent=47 // pred_check
          %p273 = pneg %p43
        $region50: #{tpu_custom_call.1} parent=47 // pred_check_branch
          %275 = sbr.rel (%p273) target = $region52
        $region51: #{tpu_custom_call.1} parent=47 // pred_region
          %276 = dma.done %s269, 768
        $region52: #{tpu_custom_call.1} parent=47 // pred_fallthru
          _
        // Predicated region
        $region53: #{tpu_custom_call.1} parent=47 // pred_check
          %p277 = pneg %p64
        $region54: #{tpu_custom_call.1} parent=47 // pred_check_branch
          %279 = sbr.rel (%p277) target = $region56
        $region55: #{tpu_custom_call.1} parent=47 // pred_region
          %280 = dma.done [#allocation5], 6144
        $region56: #{tpu_custom_call.1} parent=47 // pred_fallthru
          _
        %s281 = sand.u32 %s30, 1
        %s282 = scalar_lea.sflag [#allocation3], %s281
        %s283 = sand.u32 %s30, 1
        %s284 = smul.addr %s283, 48
        %s285 = scalar_lea.vmem [#allocation2], %s284
        %p286 = pneg %p43
        %p287 = pneg %p40
        %p288 = pneg %p64
        %p289 = pneg %p61
        %p290 = pneg %p85
        %p291 = pneg %p82
        %p292 = pneg %p106
        %p293 = pneg %p103
        %p294 = pneg %p127
        %p295 = pneg %p124
        %p296 = pneg %p148
        %p297 = pneg %p145
        %p298 = pneg %p169
        %p299 = pneg %p166
        %p300 = pneg %p195
        %p301 = pneg %p192
        %p302 = scmp.lt.s32.totalorder %s22, 2
        %s303 = scalar_select %p302, %s22, 2
        %s304 = smul.addr %s303, 8
        %s305 = scalar_lea.vmem %s7, %s304
        %p306 = scmp.lt.s32.totalorder %s22, 2
        %s307 = scalar_select %p306, %s22, 2
        %s308 = smul.addr %s307, 8
        %s309 = scalar_lea.vmem %s7, %s308
        %v311 = vld [vmem:[%s272] sm:$0xff]
        %v312 = vld [vmem:[%s272 + $0x8] sm:$0xff]
        %v313 = vld [vmem:[%s272 + $0x10] sm:$0xff]
        %v314 = vld [vmem:[%s272 + $0x18] sm:$0xff]
        %v315 = vld [vmem:[%s272 + $0x20] sm:$0xff]
        %v316 = vld [vmem:[%s272 + $0x28] sm:$0xff]
        %v317 = vpack.c.bf16 %v311, %v311
        %v318 = vpack.c.bf16 %v312, %v312
        %v319 = vpack.c.bf16 %v313, %v313
        %v320 = vpack.c.bf16 %v314, %v314
        %v321 = vpack.c.bf16 %v315, %v315
        %v322 = vpack.c.bf16 %v316, %v316
        %v323 = vld [vmem:[#allocation4] sm:$0xf]
        %v324 = vld [vmem:[#allocation4 + $0x4] sm:$0xf]
        %v325 = vld [vmem:[#allocation4 + $0x8] sm:$0xf]
        %v326 = vld [vmem:[#allocation4 + $0xc] sm:$0xf]
        %v327 = vld [vmem:[#allocation4 + $0x10] sm:$0xf]
        %v328 = vld [vmem:[#allocation4 + $0x14] sm:$0xf]
        %v329 = vld [vmem:[#allocation4 + $0x18] sm:$0xf]
        %v330 = vld [vmem:[#allocation4 + $0x1c] sm:$0xf]
        %v331 = vld [vmem:[#allocation4 + $0x20] sm:$0xf]
        %v332 = vld [vmem:[#allocation4 + $0x24] sm:$0xf]
        %v333 = vld [vmem:[#allocation4 + $0x28] sm:$0xf]
        %v334 = vld [vmem:[#allocation4 + $0x2c] sm:$0xf]
        %v335 = vld [vmem:[#allocation4 + $0x30] sm:$0xf]
        %v336 = vld [vmem:[#allocation4 + $0x34] sm:$0xf]
        %v337 = vld [vmem:[#allocation4 + $0x38] sm:$0xf]
        %v338 = vld [vmem:[#allocation4 + $0x3c] sm:$0xf]
        %v339 = vld [vmem:[#allocation4 + $0x40] sm:$0xf]
        %v340 = vld [vmem:[#allocation4 + $0x44] sm:$0xf]
        %v341 = vld [vmem:[#allocation4 + $0x48] sm:$0xf]
        %v342 = vld [vmem:[#allocation4 + $0x4c] sm:$0xf]
        %v343 = vld [vmem:[#allocation4 + $0x50] sm:$0xf]
        %v344 = vld [vmem:[#allocation4 + $0x54] sm:$0xf]
        %v345 = vld [vmem:[#allocation4 + $0x58] sm:$0xf]
        %v346 = vld [vmem:[#allocation4 + $0x5c] sm:$0xf]
        %v347 = vld [vmem:[#allocation4 + $0x60] sm:$0xf]
        %v348 = vld [vmem:[#allocation4 + $0x64] sm:$0xf]
        %v349 = vld [vmem:[#allocation4 + $0x68] sm:$0xf]
        %v350 = vld [vmem:[#allocation4 + $0x6c] sm:$0xf]
        %v351 = vld [vmem:[#allocation4 + $0x70] sm:$0xf]
        %v352 = vld [vmem:[#allocation4 + $0x74] sm:$0xf]
        %v353 = vld [vmem:[#allocation4 + $0x78] sm:$0xf]
        %v354 = vld [vmem:[#allocation4 + $0x7c] sm:$0xf]
        %v355 = vld [vmem:[#allocation4 + $0x80] sm:$0xf]
        %v356 = vld [vmem:[#allocation4 + $0x84] sm:$0xf]
        %v357 = vld [vmem:[#allocation4 + $0x88] sm:$0xf]
        %v358 = vld [vmem:[#allocation4 + $0x8c] sm:$0xf]
        %v359 = vld [vmem:[#allocation4 + $0x90] sm:$0xf]
        %v360 = vld [vmem:[#allocation4 + $0x94] sm:$0xf]
        %v361 = vld [vmem:[#allocation4 + $0x98] sm:$0xf]
        %v362 = vld [vmem:[#allocation4 + $0x9c] sm:$0xf]
        %v363 = vld [vmem:[#allocation4 + $0xa0] sm:$0xf]
        %v364 = vld [vmem:[#allocation4 + $0xa4] sm:$0xf]
        %v365 = vld [vmem:[#allocation4 + $0xa8] sm:$0xf]
        %v366 = vld [vmem:[#allocation4 + $0xac] sm:$0xf]
        %v367 = vld [vmem:[#allocation4 + $0xb0] sm:$0xf]
        %v368 = vld [vmem:[#allocation4 + $0xb4] sm:$0xf]
        %v369 = vld [vmem:[#allocation4 + $0xb8] sm:$0xf]
        %v370 = vld [vmem:[#allocation4 + $0xbc] sm:$0xf]
        %v371 = vld [vmem:[#allocation4 + $0xc0] sm:$0xf]
        %v372 = vld [vmem:[#allocation4 + $0xc4] sm:$0xf]
        %v373 = vld [vmem:[#allocation4 + $0xc8] sm:$0xf]
        %v374 = vld [vmem:[#allocation4 + $0xcc] sm:$0xf]
        %v375 = vld [vmem:[#allocation4 + $0xd0] sm:$0xf]
        %v376 = vld [vmem:[#allocation4 + $0xd4] sm:$0xf]
        %v377 = vld [vmem:[#allocation4 + $0xd8] sm:$0xf]
        %v378 = vld [vmem:[#allocation4 + $0xdc] sm:$0xf]
        %v379 = vld [vmem:[#allocation4 + $0xe0] sm:$0xf]
        %v380 = vld [vmem:[#allocation4 + $0xe4] sm:$0xf]
        %v381 = vld [vmem:[#allocation4 + $0xe8] sm:$0xf]
        %v382 = vld [vmem:[#allocation4 + $0xec] sm:$0xf]
        %v383 = vld [vmem:[#allocation4 + $0xf0] sm:$0xf]
        %v384 = vld [vmem:[#allocation4 + $0xf4] sm:$0xf]
        %v385 = vld [vmem:[#allocation4 + $0xf8] sm:$0xf]
        %v386 = vld [vmem:[#allocation4 + $0xfc] sm:$0xf]
        %v387 = vld [vmem:[#allocation4 + $0x100] sm:$0xf]
        %v388 = vld [vmem:[#allocation4 + $0x104] sm:$0xf]
        %v389 = vld [vmem:[#allocation4 + $0x108] sm:$0xf]
        %v390 = vld [vmem:[#allocation4 + $0x10c] sm:$0xf]
        %v391 = vld [vmem:[#allocation4 + $0x110] sm:$0xf]
        %v392 = vld [vmem:[#allocation4 + $0x114] sm:$0xf]
        %v393 = vld [vmem:[#allocation4 + $0x118] sm:$0xf]
        %v394 = vld [vmem:[#allocation4 + $0x11c] sm:$0xf]
        %v395 = vld [vmem:[#allocation4 + $0x120] sm:$0xf]
        %v396 = vld [vmem:[#allocation4 + $0x124] sm:$0xf]
        %v397 = vld [vmem:[#allocation4 + $0x128] sm:$0xf]
        %v398 = vld [vmem:[#allocation4 + $0x12c] sm:$0xf]
        %v399 = vld [vmem:[#allocation4 + $0x130] sm:$0xf]
        %v400 = vld [vmem:[#allocation4 + $0x134] sm:$0xf]
        %v401 = vld [vmem:[#allocation4 + $0x138] sm:$0xf]
        %v402 = vld [vmem:[#allocation4 + $0x13c] sm:$0xf]
        %v403 = vld [vmem:[#allocation4 + $0x140] sm:$0xf]
        %v404 = vld [vmem:[#allocation4 + $0x144] sm:$0xf]
        %v405 = vld [vmem:[#allocation4 + $0x148] sm:$0xf]
        %v406 = vld [vmem:[#allocation4 + $0x14c] sm:$0xf]
        %v407 = vld [vmem:[#allocation4 + $0x150] sm:$0xf]
        %v408 = vld [vmem:[#allocation4 + $0x154] sm:$0xf]
        %v409 = vld [vmem:[#allocation4 + $0x158] sm:$0xf]
        %v410 = vld [vmem:[#allocation4 + $0x15c] sm:$0xf]
        %v411 = vld [vmem:[#allocation4 + $0x160] sm:$0xf]
        %v412 = vld [vmem:[#allocation4 + $0x164] sm:$0xf]
        %v413 = vld [vmem:[#allocation4 + $0x168] sm:$0xf]
        %v414 = vld [vmem:[#allocation4 + $0x16c] sm:$0xf]
        %v415 = vld [vmem:[#allocation4 + $0x170] sm:$0xf]
        %v416 = vld [vmem:[#allocation4 + $0x174] sm:$0xf]
        %v417 = vld [vmem:[#allocation4 + $0x178] sm:$0xf]
        %v418 = vld [vmem:[#allocation4 + $0x17c] sm:$0xf]
        %v419 = vld [vmem:[%s2] sm:$0x1]
        %v421 = vlaneseq
        %v422 = vshrl.u32 %v421, 7
        %v423 = vsub.s32 0, %v422
        %v424 = vrot.slane %v419, %v423
        %v522 = vunpack.c.l.b16 %v323
        %v523 = vunpack.c.l.b16 %v324
        %v524 = vunpack.c.l.b16 %v325
        %v525 = vunpack.c.l.b16 %v326
        %v526 = vunpack.c.l.b16 %v327
        %v527 = vunpack.c.l.b16 %v328
        %v528 = vunpack.c.l.b16 %v329
        %v529 = vunpack.c.l.b16 %v330
        %v530 = vunpack.c.l.b16 %v331
        %v531 = vunpack.c.l.b16 %v332
        %v532 = vunpack.c.l.b16 %v333
        %v533 = vunpack.c.l.b16 %v334
        %v534 = vunpack.c.l.b16 %v335
        %v535 = vunpack.c.l.b16 %v336
        %v536 = vunpack.c.l.b16 %v337
        %v537 = vunpack.c.l.b16 %v338
        %v538 = vunpack.c.l.b16 %v339
        %v539 = vunpack.c.l.b16 %v340
        %v540 = vunpack.c.l.b16 %v341
        %v541 = vunpack.c.l.b16 %v342
        %v542 = vunpack.c.l.b16 %v343
        %v543 = vunpack.c.l.b16 %v344
        %v544 = vunpack.c.l.b16 %v345
        %v545 = vunpack.c.l.b16 %v346
        %v546 = vunpack.c.l.b16 %v347
        %v547 = vunpack.c.l.b16 %v348
        %v548 = vunpack.c.l.b16 %v349
        %v549 = vunpack.c.l.b16 %v350
        %v550 = vunpack.c.l.b16 %v351
        %v551 = vunpack.c.l.b16 %v352
        %v552 = vunpack.c.l.b16 %v353
        %v553 = vunpack.c.l.b16 %v354
        %v554 = vunpack.c.l.b16 %v355
        %v555 = vunpack.c.l.b16 %v356
        %v556 = vunpack.c.l.b16 %v357
        %v557 = vunpack.c.l.b16 %v358
        %v558 = vunpack.c.l.b16 %v359
        %v559 = vunpack.c.l.b16 %v360
        %v560 = vunpack.c.l.b16 %v361
        %v561 = vunpack.c.l.b16 %v362
        %v562 = vunpack.c.l.b16 %v363
        %v563 = vunpack.c.l.b16 %v364
        %v564 = vunpack.c.l.b16 %v365
        %v565 = vunpack.c.l.b16 %v366
        %v566 = vunpack.c.l.b16 %v367
        %v567 = vunpack.c.l.b16 %v368
        %v568 = vunpack.c.l.b16 %v369
        %v569 = vunpack.c.l.b16 %v370
        %v570 = vunpack.c.l.b16 %v371
        %v571 = vunpack.c.l.b16 %v372
        %v572 = vunpack.c.l.b16 %v373
        %v573 = vunpack.c.l.b16 %v374
        %v574 = vunpack.c.l.b16 %v375
        %v575 = vunpack.c.l.b16 %v376
        %v576 = vunpack.c.l.b16 %v377
        %v577 = vunpack.c.l.b16 %v378
        %v578 = vunpack.c.l.b16 %v379
        %v579 = vunpack.c.l.b16 %v380
        %v580 = vunpack.c.l.b16 %v381
        %v581 = vunpack.c.l.b16 %v382
        %v582 = vunpack.c.l.b16 %v383
        %v583 = vunpack.c.l.b16 %v384
        %v584 = vunpack.c.l.b16 %v385
        %v585 = vunpack.c.l.b16 %v386
        %v586 = vunpack.c.l.b16 %v387
        %v587 = vunpack.c.l.b16 %v388
        %v588 = vunpack.c.l.b16 %v389
        %v589 = vunpack.c.l.b16 %v390
        %v590 = vunpack.c.l.b16 %v391
        %v591 = vunpack.c.l.b16 %v392
        %v592 = vunpack.c.l.b16 %v393
        %v593 = vunpack.c.l.b16 %v394
        %v594 = vunpack.c.l.b16 %v395
        %v595 = vunpack.c.l.b16 %v396
        %v596 = vunpack.c.l.b16 %v397
        %v597 = vunpack.c.l.b16 %v398
        %v598 = vunpack.c.l.b16 %v399
        %v599 = vunpack.c.l.b16 %v400
        %v600 = vunpack.c.l.b16 %v401
        %v601 = vunpack.c.l.b16 %v402
        %v602 = vunpack.c.l.b16 %v403
        %v603 = vunpack.c.l.b16 %v404
        %v604 = vunpack.c.l.b16 %v405
        %v605 = vunpack.c.l.b16 %v406
        %v606 = vunpack.c.l.b16 %v407
        %v607 = vunpack.c.l.b16 %v408
        %v608 = vunpack.c.l.b16 %v409
        %v609 = vunpack.c.l.b16 %v410
        %v610 = vunpack.c.l.b16 %v411
        %v611 = vunpack.c.l.b16 %v412
        %v612 = vunpack.c.l.b16 %v413
        %v613 = vunpack.c.l.b16 %v414
        %v614 = vunpack.c.l.b16 %v415
        %v615 = vunpack.c.l.b16 %v416
        %v616 = vunpack.c.l.b16 %v417
        %v617 = vunpack.c.l.b16 %v418
        %v618 = vpack.c.b16 %v523, %v522
        %v619 = vpack.c.b16 %v525, %v524
        %v620 = vpack.c.b16 %v527, %v526
        %v621 = vpack.c.b16 %v529, %v528
        %v622 = vpack.c.b16 %v531, %v530
        %v623 = vpack.c.b16 %v533, %v532
        %v624 = vpack.c.b16 %v535, %v534
        %v625 = vpack.c.b16 %v537, %v536
        %v626 = vpack.c.b16 %v539, %v538
        %v627 = vpack.c.b16 %v541, %v540
        %v628 = vpack.c.b16 %v543, %v542
        %v629 = vpack.c.b16 %v545, %v544
        %v630 = vpack.c.b16 %v547, %v546
        %v631 = vpack.c.b16 %v549, %v548
        %v632 = vpack.c.b16 %v551, %v550
        %v633 = vpack.c.b16 %v553, %v552
        %v634 = vpack.c.b16 %v555, %v554
        %v635 = vpack.c.b16 %v557, %v556
        %v636 = vpack.c.b16 %v559, %v558
        %v637 = vpack.c.b16 %v561, %v560
        %v638 = vpack.c.b16 %v563, %v562
        %v639 = vpack.c.b16 %v565, %v564
        %v640 = vpack.c.b16 %v567, %v566
        %v641 = vpack.c.b16 %v569, %v568
        %v642 = vpack.c.b16 %v571, %v570
        %v643 = vpack.c.b16 %v573, %v572
        %v644 = vpack.c.b16 %v575, %v574
        %v645 = vpack.c.b16 %v577, %v576
        %v646 = vpack.c.b16 %v579, %v578
        %v647 = vpack.c.b16 %v581, %v580
        %v648 = vpack.c.b16 %v583, %v582
        %v649 = vpack.c.b16 %v585, %v584
        %v650 = vpack.c.b16 %v587, %v586
        %v651 = vpack.c.b16 %v589, %v588
        %v652 = vpack.c.b16 %v591, %v590
        %v653 = vpack.c.b16 %v593, %v592
        %v654 = vpack.c.b16 %v595, %v594
        %v655 = vpack.c.b16 %v597, %v596
        %v656 = vpack.c.b16 %v599, %v598
        %v657 = vpack.c.b16 %v601, %v600
        %v658 = vpack.c.b16 %v603, %v602
        %v659 = vpack.c.b16 %v605, %v604
        %v660 = vpack.c.b16 %v607, %v606
        %v661 = vpack.c.b16 %v609, %v608
        %v662 = vpack.c.b16 %v611, %v610
        %v663 = vpack.c.b16 %v613, %v612
        %v664 = vpack.c.b16 %v615, %v614
        %v665 = vpack.c.b16 %v617, %v616
        %714 = vmatprep.subr.bf16.mxu0 0
        %715 = vmatpush1.bf16.msra.mxu0 %v618
        %716 = vmatprep.subr.bf16.mxu0 0
        %717 = vmatpush1.bf16.msra.mxu0 %v619
        %718 = vmatprep.subr.bf16.mxu0 0
        %719 = vmatpush1.bf16.msra.mxu0 %v620
        %720 = vmatprep.subr.bf16.mxu0 0
        %721 = vmatpush1.bf16.msra.mxu0 %v621
        %722 = vmatprep.subr.bf16.mxu0 0
        %723 = vmatpush1.bf16.msra.mxu0 %v622
        %724 = vmatprep.subr.bf16.mxu0 0
        %725 = vmatpush1.bf16.msra.mxu0 %v623
        %726 = vmatprep.subr.bf16.mxu0 0
        %727 = vmatpush1.bf16.msra.mxu0 %v624
        %728 = vmatprep.subr.bf16.mxu0 0
        %729 = vmatpush1.bf16.msra.mxu0 %v625
        %730 = vmatprep.subr.bf16.mxu0 0
        %731 = vmatpush1.bf16.msra.mxu0 %v626
        %732 = vmatprep.subr.bf16.mxu0 0
        %733 = vmatpush1.bf16.msra.mxu0 %v627
        %734 = vmatprep.subr.bf16.mxu0 0
        %735 = vmatpush1.bf16.msra.mxu0 %v628
        %736 = vmatprep.subr.bf16.mxu0 0
        %737 = vmatpush1.bf16.msra.mxu0 %v629
        %738 = vmatprep.subr.bf16.mxu0 0
        %739 = vmatpush1.bf16.msra.mxu0 %v630
        %740 = vmatprep.subr.bf16.mxu0 0
        %741 = vmatpush1.bf16.msra.mxu0 %v631
        %742 = vmatprep.subr.bf16.mxu0 0
        %743 = vmatpush1.bf16.msra.mxu0 %v632
        %744 = vmatprep.subr.bf16.mxu0 0
        %745 = vmatpush1.bf16.msra.mxu0 %v633
        %746 = vmatprep.mubr.bf16.mxu0 %v318
        %747 = vmatmul.mubr.bf16.gmra.mrb[0].mxu0 %v317
        %v748 = vpop.f32.mrb[0].mxu0
        %v749 = vadd.f32 %v424, %v748
        %v750 = vpop.f32.mrb[0].mxu0
        %v751 = vpop.f32.mrb[0].mxu0
        %v752 = vpop.f32.mrb[0].mxu0
        %753 = vdwg.mxu0
        %754 = vmatprep.subr.bf16.mxu0 0
        %755 = vmatpush1.bf16.msra.mxu0 %v634
        %756 = vmatprep.subr.bf16.mxu0 0
        %757 = vmatpush1.bf16.msra.mxu0 %v635
        %758 = vmatprep.subr.bf16.mxu0 0
        %759 = vmatpush1.bf16.msra.mxu0 %v636
        %760 = vmatprep.subr.bf16.mxu0 0
        %761 = vmatpush1.bf16.msra.mxu0 %v637
        %762 = vmatprep.subr.bf16.mxu0 0
        %763 = vmatpush1.bf16.msra.mxu0 %v638
        %764 = vmatprep.subr.bf16.mxu0 0
        %765 = vmatpush1.bf16.msra.mxu0 %v639
        %766 = vmatprep.subr.bf16.mxu0 0
        %767 = vmatpush1.bf16.msra.mxu0 %v640
        %768 = vmatprep.subr.bf16.mxu0 0
        %769 = vmatpush1.bf16.msra.mxu0 %v641
        %770 = vmatprep.subr.bf16.mxu0 0
        %771 = vmatpush1.bf16.msra.mxu0 %v642
        %772 = vmatprep.subr.bf16.mxu0 0
        %773 = vmatpush1.bf16.msra.mxu0 %v643
        %774 = vmatprep.subr.bf16.mxu0 0
        %775 = vmatpush1.bf16.msra.mxu0 %v644
        %776 = vmatprep.subr.bf16.mxu0 0
        %777 = vmatpush1.bf16.msra.mxu0 %v645
        %778 = vmatprep.subr.bf16.mxu0 0
        %779 = vmatpush1.bf16.msra.mxu0 %v646
        %780 = vmatprep.subr.bf16.mxu0 0
        %781 = vmatpush1.bf16.msra.mxu0 %v647
        %782 = vmatprep.subr.bf16.mxu0 0
        %783 = vmatpush1.bf16.msra.mxu0 %v648
        %784 = vmatprep.subr.bf16.mxu0 0
        %785 = vmatpush1.bf16.msra.mxu0 %v649
        %786 = vmatprep.mubr.bf16.mxu0 %v320
        %787 = vmatmul.mubr.bf16.gmra.mrb[0].mxu0 %v319
        %v788 = vpop.f32.mrb[0].mxu0
        %v789 = vadd.f32 %v749, %v788
        %v790 = vpop.f32.mrb[0].mxu0
        %v791 = vpop.f32.mrb[0].mxu0
        %v792 = vpop.f32.mrb[0].mxu0
        %793 = vdwg.mxu0
        %794 = vmatprep.subr.bf16.mxu0 0
        %795 = vmatpush1.bf16.msra.mxu0 %v650
        %796 = vmatprep.subr.bf16.mxu0 0
        %797 = vmatpush1.bf16.msra.mxu0 %v651
        %798 = vmatprep.subr.bf16.mxu0 0
        %799 = vmatpush1.bf16.msra.mxu0 %v652
        %800 = vmatprep.subr.bf16.mxu0 0
        %801 = vmatpush1.bf16.msra.mxu0 %v653
        %802 = vmatprep.subr.bf16.mxu0 0
        %803 = vmatpush1.bf16.msra.mxu0 %v654
        %804 = vmatprep.subr.bf16.mxu0 0
        %805 = vmatpush1.bf16.msra.mxu0 %v655
        %806 = vmatprep.subr.bf16.mxu0 0
        %807 = vmatpush1.bf16.msra.mxu0 %v656
        %808 = vmatprep.subr.bf16.mxu0 0
        %809 = vmatpush1.bf16.msra.mxu0 %v657
        %810 = vmatprep.subr.bf16.mxu0 0
        %811 = vmatpush1.bf16.msra.mxu0 %v658
        %812 = vmatprep.subr.bf16.mxu0 0
        %813 = vmatpush1.bf16.msra.mxu0 %v659
        %814 = vmatprep.subr.bf16.mxu0 0
        %815 = vmatpush1.bf16.msra.mxu0 %v660
        %816 = vmatprep.subr.bf16.mxu0 0
        %817 = vmatpush1.bf16.msra.mxu0 %v661
        %818 = vmatprep.subr.bf16.mxu0 0
        %819 = vmatpush1.bf16.msra.mxu0 %v662
        %820 = vmatprep.subr.bf16.mxu0 0
        %821 = vmatpush1.bf16.msra.mxu0 %v663
        %822 = vmatprep.subr.bf16.mxu0 0
        %823 = vmatpush1.bf16.msra.mxu0 %v664
        %824 = vmatprep.subr.bf16.mxu0 0
        %825 = vmatpush1.bf16.msra.mxu0 %v665
        %826 = vmatprep.mubr.bf16.mxu0 %v322
        %827 = vmatmul.mubr.bf16.gmra.mrb[0].mxu0 %v321
        %v828 = vpop.f32.mrb[0].mxu0
        %v829 = vadd.f32 %v789, %v828
        %v830 = vpop.f32.mrb[0].mxu0
        %v831 = vpop.f32.mrb[0].mxu0
        %v832 = vpop.f32.mrb[0].mxu0
        %833 = vdwg.mxu0
        %v834 = vmax.f32 %v829, 0.0
        %v835 = vpack.c.bf16 %v834, %v834
        %v836 = vld [vmem:[%s3] sm:$0xf]
        %v837 = vld [vmem:[%s3 + $0x4] sm:$0xf]
        %v838 = vld [vmem:[%s3 + $0x8] sm:$0xf]
        %v839 = vld [vmem:[%s3 + $0xc] sm:$0xf]
        %v840 = vld [vmem:[%s3 + $0x10] sm:$0xf]
        %v841 = vld [vmem:[%s3 + $0x14] sm:$0xf]
        %v842 = vld [vmem:[%s3 + $0x18] sm:$0xf]
        %v843 = vld [vmem:[%s3 + $0x1c] sm:$0xf]
        %v844 = vld [vmem:[%s3 + $0x20] sm:$0xf]
        %v845 = vld [vmem:[%s3 + $0x24] sm:$0xf]
        %v846 = vld [vmem:[%s3 + $0x28] sm:$0xf]
        %v847 = vld [vmem:[%s3 + $0x2c] sm:$0xf]
        %v848 = vld [vmem:[%s3 + $0x30] sm:$0xf]
        %v849 = vld [vmem:[%s3 + $0x34] sm:$0xf]
        %v850 = vld [vmem:[%s3 + $0x38] sm:$0xf]
        %v851 = vld [vmem:[%s3 + $0x3c] sm:$0xf]
        %v852 = vld [vmem:[%s4] sm:$0x1]
        %v854 = vlaneseq
        %v855 = vshrl.u32 %v854, 7
        %v856 = vsub.s32 0, %v855
        %v857 = vrot.slane %v852, %v856
        %v875 = vunpack.c.l.b16 %v836
        %v876 = vunpack.c.l.b16 %v837
        %v877 = vunpack.c.l.b16 %v838
        %v878 = vunpack.c.l.b16 %v839
        %v879 = vunpack.c.l.b16 %v840
        %v880 = vunpack.c.l.b16 %v841
        %v881 = vunpack.c.l.b16 %v842
        %v882 = vunpack.c.l.b16 %v843
        %v883 = vunpack.c.l.b16 %v844
        %v884 = vunpack.c.l.b16 %v845
        %v885 = vunpack.c.l.b16 %v846
        %v886 = vunpack.c.l.b16 %v847
        %v887 = vunpack.c.l.b16 %v848
        %v888 = vunpack.c.l.b16 %v849
        %v889 = vunpack.c.l.b16 %v850
        %v890 = vunpack.c.l.b16 %v851
        %v891 = vpack.c.b16 %v876, %v875
        %v892 = vpack.c.b16 %v878, %v877
        %v893 = vpack.c.b16 %v880, %v879
        %v894 = vpack.c.b16 %v882, %v881
        %v895 = vpack.c.b16 %v884, %v883
        %v896 = vpack.c.b16 %v886, %v885
        %v897 = vpack.c.b16 %v888, %v887
        %v898 = vpack.c.b16 %v890, %v889
        %907 = vmatprep.subr.bf16.mxu0 0
        %908 = vmatpush1.bf16.msra.mxu0 %v891
        %909 = vmatprep.subr.bf16.mxu0 0
        %910 = vmatpush1.bf16.msra.mxu0 %v892
        %911 = vmatprep.subr.bf16.mxu0 0
        %912 = vmatpush1.bf16.msra.mxu0 %v893
        %913 = vmatprep.subr.bf16.mxu0 0
        %914 = vmatpush1.bf16.msra.mxu0 %v894
        %915 = vmatprep.subr.bf16.mxu0 0
        %916 = vmatpush1.bf16.msra.mxu0 %v895
        %917 = vmatprep.subr.bf16.mxu0 0
        %918 = vmatpush1.bf16.msra.mxu0 %v896
        %919 = vmatprep.subr.bf16.mxu0 0
        %920 = vmatpush1.bf16.msra.mxu0 %v897
        %921 = vmatprep.subr.bf16.mxu0 0
        %922 = vmatpush1.bf16.msra.mxu0 %v898
        %923 = vmatprep.subr.bf16.mxu0 0
        %924 = vmatpush1.bf16.msra.mxu0 0
        %925 = vmatprep.subr.bf16.mxu0 0
        %926 = vmatpush1.bf16.msra.mxu0 0
        %927 = vmatprep.subr.bf16.mxu0 0
        %928 = vmatpush1.bf16.msra.mxu0 0
        %929 = vmatprep.subr.bf16.mxu0 0
        %930 = vmatpush1.bf16.msra.mxu0 0
        %931 = vmatprep.subr.bf16.mxu0 0
        %932 = vmatpush1.bf16.msra.mxu0 0
        %933 = vmatprep.subr.bf16.mxu0 0
        %934 = vmatpush1.bf16.msra.mxu0 0
        %935 = vmatprep.subr.bf16.mxu0 0
        %936 = vmatpush1.bf16.msra.mxu0 0
        %937 = vmatprep.subr.bf16.mxu0 0
        %938 = vmatpush1.bf16.msra.mxu0 0
        %939 = vmatprep.mubr.bf16.mxu0 0
        %940 = vmatmul.mubr.bf16.gmra.mrb[0].mxu0 %v835
        %v941 = vpop.f32.mrb[0].mxu0
        %v942 = vadd.f32 %v857, %v941
        %v943 = vpop.f32.mrb[0].mxu0
        %v944 = vpop.f32.mrb[0].mxu0
        %v945 = vpop.f32.mrb[0].mxu0
        %946 = vdwg.mxu0
        %v947 = vmax.f32 %v942, 0.0
        %v948 = vpack.c.bf16 %v947, %v947
        %v949 = vld [vmem:[%s5] sm:$0xf]
        %v950 = vld [vmem:[%s5 + $0x4] sm:$0xf]
        %v951 = vld [vmem:[%s5 + $0x8] sm:$0xf]
        %v952 = vld [vmem:[%s5 + $0xc] sm:$0xf]
        %v953 = vld [vmem:[%s5 + $0x10] sm:$0xf]
        %v954 = vld [vmem:[%s5 + $0x14] sm:$0xf]
        %v955 = vld [vmem:[%s5 + $0x18] sm:$0xf]
        %v956 = vld [vmem:[%s5 + $0x1c] sm:$0xf]
        %v957 = vld [vmem:[%s6] sm:$0x1]
        %v959 = vlaneseq
        %v960 = vshrl.u32 %v959, 7
        %v961 = vsub.s32 0, %v960
        %v962 = vrot.slane %v957, %v961
        %v972 = vunpack.c.l.b16 %v949
        %v973 = vunpack.c.l.b16 %v950
        %v974 = vunpack.c.l.b16 %v951
        %v975 = vunpack.c.l.b16 %v952
        %v976 = vunpack.c.l.b16 %v953
        %v977 = vunpack.c.l.b16 %v954
        %v978 = vunpack.c.l.b16 %v955
        %v979 = vunpack.c.l.b16 %v956
        %v980 = vpack.c.b16 %v973, %v972
        %v981 = vpack.c.b16 %v975, %v974
        %v982 = vpack.c.b16 %v977, %v976
        %v983 = vpack.c.b16 %v979, %v978
        %vm988 = vcmask 523264
        %v990 = vsel %vm988, %v948, 0
        %992 = vmatprep.subr.bf16.mxu0 0
        %993 = vmatpush1.bf16.msra.mxu0 %v980
        %994 = vmatprep.subr.bf16.mxu0 0
        %995 = vmatpush1.bf16.msra.mxu0 %v981
        %996 = vmatprep.subr.bf16.mxu0 0
        %997 = vmatpush1.bf16.msra.mxu0 %v982
        %998 = vmatprep.subr.bf16.mxu0 0
        %999 = vmatpush1.bf16.msra.mxu0 %v983
        %1000 = vmatprep.subr.bf16.mxu0 0
        %1001 = vmatpush1.bf16.msra.mxu0 0
        %1002 = vmatprep.subr.bf16.mxu0 0
        %1003 = vmatpush1.bf16.msra.mxu0 0
        %1004 = vmatprep.subr.bf16.mxu0 0
        %1005 = vmatpush1.bf16.msra.mxu0 0
        %1006 = vmatprep.subr.bf16.mxu0 0
        %1007 = vmatpush1.bf16.msra.mxu0 0
        %1008 = vmatprep.subr.bf16.mxu0 0
        %1009 = vmatpush1.bf16.msra.mxu0 0
        %1010 = vmatprep.subr.bf16.mxu0 0
        %1011 = vmatpush1.bf16.msra.mxu0 0
        %1012 = vmatprep.subr.bf16.mxu0 0
        %1013 = vmatpush1.bf16.msra.mxu0 0
        %1014 = vmatprep.subr.bf16.mxu0 0
        %1015 = vmatpush1.bf16.msra.mxu0 0
        %1016 = vmatprep.subr.bf16.mxu0 0
        %1017 = vmatpush1.bf16.msra.mxu0 0
        %1018 = vmatprep.subr.bf16.mxu0 0
        %1019 = vmatpush1.bf16.msra.mxu0 0
        %1020 = vmatprep.subr.bf16.mxu0 0
        %1021 = vmatpush1.bf16.msra.mxu0 0
        %1022 = vmatprep.subr.bf16.mxu0 0
        %1023 = vmatpush1.bf16.msra.mxu0 0
        %1024 = vmatprep.mubr.bf16.mxu0 0
        %1025 = vmatmul.mubr.bf16.gmra.mrb[0].mxu0 %v990
        %v1026 = vpop.f32.mrb[0].mxu0
        %v1027 = vadd.f32 %v962, %v1026
        %v1028 = vpop.f32.mrb[0].mxu0
        %v1029 = vpop.f32.mrb[0].mxu0
        %v1030 = vpop.f32.mrb[0].mxu0
        %1031 = vdwg.mxu0
        %vm1032 = vcmask 64512
        %1033 = vst.msk [vmem:[%s309] sm:$0xff] %vm1032, %v1027
        %p1034 = scmp.lt.s32.totalorder %s22, 2
        %s1035 = scalar_select %p1034, %s22, 2
        %s1036 = smul.addr %s1035, 8
        %s1037 = scalar_lea.vmem %s7, %s1036
        // Predicated region
        $region57: #{tpu_custom_call.1} parent=47 // pred_check
          %p1038 = pneg %p192
        $region58: #{tpu_custom_call.1} parent=47 // pred_check_branch
          %1040 = sbr.rel (%p1038) target = $region60
        $region59: #{tpu_custom_call.1} parent=47 // pred_region
          _
        $region60: #{tpu_custom_call.1} parent=47 // pred_fallthru
          _
      $region48: #{tpu_custom_call.1} parent=5 // pred_fallthru
        _
      %p1041 = scmp.le.s32.totalorder 2, %s17
      // Predicated region
      $region61: #{tpu_custom_call.1} parent=5 // pred_check
        %p1042 = pneg %p1041
      $region62: #{tpu_custom_call.1} parent=5 // pred_check_branch
        %1044 = sbr.rel (%p1042) target = $region64
      $region63: #{tpu_custom_call.1} parent=5 // pred_region
        %s1045 = ssub.s32 %s17, 2
        // Predicated region
        $region65: #{tpu_custom_call.1} parent=63 // pred_check
          %p1046 = pneg %p198
        $region66: #{tpu_custom_call.1} parent=63 // pred_check_branch
          %1048 = sbr.rel (%p1046) target = $region68
        $region67: #{tpu_custom_call.1} parent=63 // pred_region
          %p1049 = scmp.lt.s32.totalorder %s23, 2
          %s1050 = scalar_select %p1049, %s23, 2
          %s1051 = smul.addr %s1050, 8
          %s1052 = scalar_lea.vmem %s7, %s1051
        $region68: #{tpu_custom_call.1} parent=63 // pred_fallthru
          _
      $region64: #{tpu_custom_call.1} parent=5 // pred_fallthru
        _
    $region6: #{tpu_custom_call.1} parent=1 // loop_footer
      %s21 = sadd.s32 1, %s17
    $region7: #{tpu_custom_call.1} parent=1 // loop_footer_branch
      %16 = sbr.rel target = $region3
    $region8: #{tpu_custom_call.1} parent=1 // loop_exit
      _
    %1053 = vsyncpa [#allocation3], 1
    %s1054 = scalar_lea.sflag [#allocation3], 1
    %1055 = vsyncpa %s1054, 1
    %1056 = vsyncpa [#allocation5], 1

</llo_original>
